<compile_context>
chip_gen: v6e
topology: v6e:2x2x1
jax: 0.10.0
libtpu: 0.0.40
codegen_flags: <defaults>
</compile_context>

<pallas_src>
import math
import functools

import jax
import jax.numpy as jnp
from jax.experimental import pallas as pl
from jax.experimental.pallas import tpu as pltpu


# ---------------------------------------------------------------------------
# Pallas kernel: full-K / full-N matmul with fused bias + activation epilogue
# ---------------------------------------------------------------------------
def _apply_act(r, act):
    if act == "relu":
        return jnp.maximum(r, 0.0)
    if act == "lrelu0.1":
        return jnp.where(r >= 0, r, 0.1 * r)
    if act == "lrelu0.01":
        return jnp.where(r >= 0, r, 0.01 * r)
    return r


def _mm_kernel(a_ref, b_ref, bias_ref, o_ref, *, act):
    # Single K step -> no accumulator scratch; epilogue fused straight into o_ref.
    r = jnp.dot(a_ref[...], b_ref[...], preferred_element_type=jnp.float32)
    o_ref[...] = _apply_act(r + bias_ref[...], act).astype(o_ref.dtype)


def _pick_tm(m):
    if m >= 1024:
        return 512      # big-M layers (head / TSA / upsampler): wide tiles, >=2 steps
    if m >= 256:
        return 128      # mid layers: still >=2 parallel M tiles (v7x 2-TC)
    return 32


def matmul_bias_act(a, b, bias, act="none"):
    """act(a @ b + bias); a:(M,K), b:(K,N) -> (M,N) bf16 (f32 accumulation)."""
    M, K = a.shape
    _, N = b.shape
    a = a.astype(jnp.bfloat16)
    b = b.astype(jnp.bfloat16)
    bias2 = bias.astype(jnp.float32).reshape(1, N)

    if M <= 16:
        # Deep-UNet micro-matmuls: a pallas_call launch costs more than the compute.
        r = jnp.dot(a, b, preferred_element_type=jnp.float32) + bias2
        return _apply_act(r, act).astype(jnp.bfloat16)

    # Keep bf16 sublane packing aligned for the odd-K head convs (K = 27 -> 32).
    if K % 16 != 0:
        Kp = -(-K // 16) * 16
        a = jnp.pad(a, ((0, 0), (0, Kp - K)))
        b = jnp.pad(b, ((0, Kp - K), (0, 0)))
        K = Kp

    tm = _pick_tm(M)
    Mp = -(-M // tm) * tm
    if Mp != M:
        a = jnp.pad(a, ((0, Mp - M), (0, 0)))

    out = pl.pallas_call(
        functools.partial(_mm_kernel, act=act),
        out_shape=jax.ShapeDtypeStruct((Mp, N), jnp.bfloat16),
        grid_spec=pltpu.PrefetchScalarGridSpec(
            num_scalar_prefetch=0,
            grid=(Mp // tm,),                      # K collapsed to one step
            in_specs=[
                pl.BlockSpec((tm, K), lambda i: (i, 0)),
                pl.BlockSpec((K, N), lambda i: (0, 0)),
                pl.BlockSpec((1, N), lambda i: (0, 0)),
            ],
            out_specs=pl.BlockSpec((tm, N), lambda i: (i, 0)),
        ),
        compiler_params=pltpu.CompilerParams(dimension_semantics=("parallel",)),
    )(a, b, bias2)
    return out if Mp == M else out[:M]


# ---------------------------------------------------------------------------
# Conv layers built on the Pallas matmul
# ---------------------------------------------------------------------------
@functools.partial(jax.jit, static_argnames=("stride", "padding", "act"))
def conv2d(x, params, stride=1, padding=0, act="none"):
    """x: (N, H, W, Cin) bf16, w: (KH, KW, Cin, Cout) bf16, b: (Cout,) f32."""
    w, b = params
    N, H, W, _ = x.shape
    KH, KW, Cin, Cout = w.shape
    xp = jnp.pad(x, ((0, 0), (padding, padding), (padding, padding), (0, 0)))
    Ho = (H + 2 * padding - KH) // stride + 1
    Wo = (W + 2 * padding - KW) // stride + 1
    cols = [xp[:, di:di + stride * Ho:stride, dj:dj + stride * Wo:stride, :]
            for di in range(KH) for dj in range(KW)]
    patches = cols[0] if len(cols) == 1 else jnp.concatenate(cols, axis=-1)
    A = patches.reshape(N * Ho * Wo, KH * KW * Cin)
    B = w.reshape(KH * KW * Cin, Cout)
    out = matmul_bias_act(A, B, b, act=act)
    return out.reshape(N, Ho, Wo, Cout)


@functools.partial(jax.jit, static_argnames=("act",))
def conv_transpose2d_2x2_s2(x, params, act="none"):
    """nn.ConvTranspose2d(Cin, Cout, 2, stride=2).  w: (Cin, 2, 2, Cout)."""
    w, b = params
    N, H, W, Cin = x.shape
    _, KH, KW, Cout = w.shape
    A = x.reshape(N * H * W, Cin)
    B = w.reshape(Cin, KH * KW * Cout)
    out = matmul_bias_act(A, B, jnp.tile(b, KH * KW), act=act)
    out = out.reshape(N, H, W, KH, KW, Cout)
    out = out.transpose(0, 1, 3, 2, 4, 5).reshape(N, H * KH, W * KW, Cout)
    return out


# ---------------------------------------------------------------------------
# Plain-JAX glue ops (pooling / resize / pixel-shuffle)
# ---------------------------------------------------------------------------
def max_pool_3s2p1(x):
    return jax.lax.reduce_window(
        x, jnp.array(-jnp.inf, x.dtype), jax.lax.max, (1, 3, 3, 1), (1, 2, 2, 1),
        [(0, 0), (1, 1), (1, 1), (0, 0)])


def avg_pool_3s2p1(x):
    s = jax.lax.reduce_window(
        x, jnp.array(0.0, x.dtype), jax.lax.add, (1, 3, 3, 1), (1, 2, 2, 1),
        [(0, 0), (1, 1), (1, 1), (0, 0)])
    return s / 9.0  # count_include_pad=True (PyTorch default)


def bilinear_resize(x, ho, wo):
    n, _, _, c = x.shape
    return jax.image.resize(x, (n, ho, wo, c), method="bilinear")


def pixel_shuffle2(x):
    N, H, W, C4 = x.shape
    C = C4 // 4
    x = x.reshape(N, H, W, C, 2, 2)
    x = x.transpose(0, 1, 4, 2, 5, 3)
    return x.reshape(N, H * 2, W * 2, C)


# ---------------------------------------------------------------------------
# Parameter initialization (deterministic, PyTorch-default-style uniform)
# weights stored as bf16 (MXU operands), biases kept f32 (epilogue).
# ---------------------------------------------------------------------------
def _init_conv(key, kh, kw, cin, cout):
    k1, k2 = jax.random.split(key)
    std = 1.0 / math.sqrt(kh * kw * cin)
    w = jax.random.uniform(k1, (kh, kw, cin, cout), jnp.float32, -std, std)
    b = jax.random.uniform(k2, (cout,), jnp.float32, -std, std)
    return (w.astype(jnp.bfloat16), b)


def _init_convT(key, cin, cout, k=2):
    k1, k2 = jax.random.split(key)
    std = 1.0 / math.sqrt(cin * k * k)
    w = jax.random.uniform(k1, (cin, k, k, cout), jnp.float32, -std, std)
    b = jax.random.uniform(k2, (cout,), jnp.float32, -std, std)
    return (w.astype(jnp.bfloat16), b)


def init_resblock2(key, cin, cout):
    ks = jax.random.split(key, 3)
    return dict(c1=_init_conv(ks[0], 3, 3, cin, cout),
                c2=_init_conv(ks[1], 3, 3, cout, cout),
                sc=_init_conv(ks[2], 1, 1, cin, cout))


def init_edsr_resblock(key, dim):
    ks = jax.random.split(key, 2)
    return dict(c1=_init_conv(ks[0], 3, 3, dim, dim),
                c2=_init_conv(ks[1], 3, 3, dim, dim))


def init_tsa(key, nf, nframe):
    ks = jax.random.split(key, 13)
    return dict(
        ta1=_init_conv(ks[0], 3, 3, nf, nf),
        ta2=_init_conv(ks[1], 3, 3, nf, nf),
        fuse=_init_conv(ks[2], 1, 1, nframe * nf, nf),
        sa1=_init_conv(ks[3], 1, 1, nframe * nf, nf),
        sa2=_init_conv(ks[4], 1, 1, 2 * nf, nf),
        sa3=_init_conv(ks[5], 3, 3, nf, nf),
        sa4=_init_conv(ks[6], 1, 1, nf, nf),
        sa5=_init_conv(ks[7], 3, 3, nf, nf),
        sal1=_init_conv(ks[8], 1, 1, nf, nf),
        sal2=_init_conv(ks[9], 3, 3, 2 * nf, nf),
        sal3=_init_conv(ks[10], 3, 3, nf, nf),
        saadd1=_init_conv(ks[11], 1, 1, nf, nf),
        saadd2=_init_conv(ks[12], 1, 1, nf, nf),
    )


def init_unet(key, dim=32, burst=14, in_ch=3, out_ch=3):
    keys = list(jax.random.split(key, 32))
    it = iter(keys)
    P = {}
    P["head"] = _init_conv(next(it), 3, 3, in_ch, dim)
    P["body"] = [init_edsr_resblock(next(it), dim) for _ in range(2)]
    P["fusion"] = init_tsa(next(it), dim, burst)
    for i in range(1, 10):
        cin = dim if i <= 5 else 2 * dim
        P[f"cb{i}"] = init_resblock2(next(it), cin, dim)
    for i in range(1, 5):
        P[f"pool{i}"] = _init_conv(next(it), 4, 4, dim, dim)
    for i in range(6, 10):
        P[f"upv{i}"] = _init_convT(next(it), dim, dim)
    P["ups1"] = _init_conv(next(it), 3, 3, dim, 4 * dim)
    P["ups2"] = _init_conv(next(it), 3, 3, dim, 4 * dim)
    P["conv_last"] = _init_conv(next(it), 3, 3, dim, out_ch)
    P["conv_head"] = _init_conv(next(it), 3, 3, out_ch, dim)
    P["conv_last_1"] = _init_conv(next(it), 3, 3, dim, out_ch)
    return P


# ---------------------------------------------------------------------------
# Module forward logic
# ---------------------------------------------------------------------------
def resblock2(p, x):
    # ResBlock2: conv3 -> lrelu -> conv3 -> lrelu   plus   1x1 shortcut
    out1 = conv2d(x, p["c1"], stride=1, padding=1, act="lrelu0.01")
    out1 = conv2d(out1, p["c2"], stride=1, padding=1, act="lrelu0.01")
    out2 = conv2d(x, p["sc"], stride=1, padding=0, act="none")
    return out1 + out2


def edsr_resblock(p, x):
    r = conv2d(x, p["c1"], stride=1, padding=1, act="relu")
    r = conv2d(r, p["c2"], stride=1, padding=1, act="none")
    return x + r


def tsa_fusion(p, feat, center_idx):
    # TODO(synk): TSAFusion source not given; reconstructed from BasicSR EDVR.
    b, t, h, w, c = feat.shape
    emb_ref = conv2d(feat[:, center_idx], p["ta1"], stride=1, padding=1)
    emb = conv2d(feat.reshape(b * t, h, w, c), p["ta2"], stride=1, padding=1)
    emb = emb.reshape(b, t, h, w, c)
    corr = jnp.sum(emb.astype(jnp.float32) *
                   emb_ref.astype(jnp.float32)[:, None], axis=-1)      # (b, t, h, w)
    corr_prob = jax.nn.sigmoid(corr)[..., None]                        # (b, t, h, w, 1)
    aligned = (feat.astype(jnp.float32) * corr_prob)
    aligned = aligned.transpose(0, 2, 3, 1, 4).reshape(b, h, w, t * c)
    aligned = aligned.astype(jnp.bfloat16)

    feat_fused = conv2d(aligned, p["fuse"], stride=1, padding=0, act="lrelu0.1")

    attn = conv2d(aligned, p["sa1"], stride=1, padding=0, act="lrelu0.1")
    attn = conv2d(jnp.concatenate([max_pool_3s2p1(attn), avg_pool_3s2p1(attn)], -1),
                  p["sa2"], stride=1, padding=0, act="lrelu0.1")          # (b, h/2, w/2)
    attn_level = conv2d(attn, p["sal1"], stride=1, padding=0, act="lrelu0.1")
    attn_level = conv2d(jnp.concatenate([max_pool_3s2p1(attn_level),
                                         avg_pool_3s2p1(attn_level)], -1),
                        p["sal2"], stride=1, padding=1, act="lrelu0.1")   # (b, h/4, w/4)
    attn_level = conv2d(attn_level, p["sal3"], stride=1, padding=1, act="lrelu0.1")
    # upsample x2: h/4 -> h/2 (back to attn's resolution)
    attn_level = bilinear_resize(attn_level, attn.shape[1], attn.shape[2])
    attn = conv2d(attn, p["sa3"], stride=1, padding=1, act="lrelu0.1") + attn_level
    attn = conv2d(attn, p["sa4"], stride=1, padding=0, act="lrelu0.1")
    attn = bilinear_resize(attn, attn.shape[1] * 2, attn.shape[2] * 2)    # h/2 -> h
    attn = conv2d(attn, p["sa5"], stride=1, padding=1, act="none")
    attn_add = conv2d(conv2d(attn, p["saadd1"], stride=1, padding=0, act="lrelu0.1"),
                      p["saadd2"], stride=1, padding=0, act="none")
    attn = jax.nn.sigmoid(attn.astype(jnp.float32))
    out = feat_fused.astype(jnp.float32) * attn * 2 + attn_add.astype(jnp.float32)
    return out.astype(jnp.bfloat16)


def unet_pass(P, y):
    conv1 = resblock2(P["cb1"], y)
    pool1 = conv2d(conv1, P["pool1"], stride=2, padding=1)
    conv2 = resblock2(P["cb2"], pool1)
    pool2 = conv2d(conv2, P["pool2"], stride=2, padding=1)
    conv3 = resblock2(P["cb3"], pool2)
    pool3 = conv2d(conv3, P["pool3"], stride=2, padding=1)
    conv4 = resblock2(P["cb4"], pool3)
    pool4 = conv2d(conv4, P["pool4"], stride=2, padding=1)
    conv5 = resblock2(P["cb5"], pool4)
    up6 = conv_transpose2d_2x2_s2(conv5, P["upv6"])
    conv6 = resblock2(P["cb6"], jnp.concatenate([up6, conv4], -1))
    up7 = conv_transpose2d_2x2_s2(conv6, P["upv7"])
    conv7 = resblock2(P["cb7"], jnp.concatenate([up7, conv3], -1))
    up8 = conv_transpose2d_2x2_s2(conv7, P["upv8"])
    conv8 = resblock2(P["cb8"], jnp.concatenate([up8, conv2], -1))
    up9 = conv_transpose2d_2x2_s2(conv8, P["upv9"])
    conv9 = resblock2(P["cb9"], jnp.concatenate([up9, conv1], -1))
    return conv9


def unet_dn_forward(P, x_btchw, dim=32, scale=4):
    b, t, c, h, w = x_btchw.shape
    assert t == 14, "Frame should be 14!"
    x = jnp.transpose(x_btchw, (0, 1, 3, 4, 2))            # (b, t, h, w, c) NHWC
    x_base = x[:, 0].astype(jnp.float32)                   # keep base path in f32
    x_base_scale = scale
    x = x.astype(jnp.bfloat16)

    # head + body (EDSR ResBlocks) on all frames
    feat = conv2d(x.reshape(b * t, h, w, c), P["head"], stride=1, padding=1)
    for rb in P["body"]:
        feat = edsr_resblock(rb, feat)
    feat = feat.reshape(b, t, h, w, dim)

    fusion_feat = tsa_fusion(P["fusion"], feat, center_idx=t // 2)

    conv9 = unet_pass(P, fusion_feat)

    # Upsampler (EDSR): two x2 pixel-shuffle stages for scale=4
    u = conv2d(conv9, P["ups1"], stride=1, padding=1)
    u = pixel_shuffle2(u)
    u = conv2d(u, P["ups2"], stride=1, padding=1)
    u = pixel_shuffle2(u)
    out = conv2d(u, P["conv_last"], stride=1, padding=1)

    base = bilinear_resize(x_base, h * x_base_scale, w * x_base_scale)

    y = conv2d(out, P["conv_head"], stride=1, padding=1)
    conv9b = unet_pass(P, y)          # same shared weights, second pass
    out1 = conv2d(conv9b, P["conv_last_1"], stride=1, padding=1)

    res = base + out.astype(jnp.float32) + out1.astype(jnp.float32)
    return jnp.transpose(res, (0, 3, 1, 2))                # back to NCHW, f32


# ---------------------------------------------------------------------------
if __name__ == "__main__":
    key = jax.random.PRNGKey(0)
    kp, kx = jax.random.split(key)

    dim = 32
    b, t, c, h, w = 1, 14, 3, 16, 16
    scale = 4

    params = init_unet(kp, dim=dim, burst=t, in_ch=c, out_ch=c)
    x = jax.random.normal(kx, (b, t, c, h, w), jnp.float32)

    out = unet_dn_forward(params, x, dim=dim, scale=scale)
    out = jax.block_until_ready(out)
    assert out.shape == (b, c, h * scale, w * scale), out.shape
    assert jnp.all(jnp.isfinite(out))
    print("KERNEL_OK")
</pallas_src>

<mosaic_0001>
module attributes {stable_mosaic.version = 11 : i64} {
  func.func @_mm_kernel(%arg0: i32, %arg1: memref<512x32xbf16, #tpu.memory_space<vmem>>, %arg2: memref<32x32xbf16, #tpu.memory_space<vmem>>, %arg3: memref<1x32xf32, #tpu.memory_space<vmem>>, %arg4: memref<512x32xbf16, #tpu.memory_space<vmem>>) attributes {dimension_semantics = [#tpu.dimension_semantics<parallel>], iteration_bounds = array<i64: 7>, scalar_prefetch = 0 : i64, scratch_operands = 0 : i64, tpu.core_type = #tpu.core_type<tc>, window_params = [{transform_indices = @transform_0, window_bounds = array<i64: 512, 32>}, {pipeline_mode = #tpu.pipeline_mode<synchronous>, transform_indices = @transform_1, window_bounds = array<i64: 32, 32>}, {pipeline_mode = #tpu.pipeline_mode<synchronous>, transform_indices = @transform_2, window_bounds = array<i64: 1, 32>}, {transform_indices = @transform_3, window_bounds = array<i64: 512, 32>}]} {
    %c0 = arith.constant 0 : index
    %c0_0 = arith.constant 0 : index
    %0 = vector.load %arg1[%c0, %c0_0] : memref<512x32xbf16, #tpu.memory_space<vmem>>, vector<512x32xbf16>
    %c0_1 = arith.constant 0 : index
    %c0_2 = arith.constant 0 : index
    %1 = vector.load %arg2[%c0_1, %c0_2] : memref<32x32xbf16, #tpu.memory_space<vmem>>, vector<32x32xbf16>
    %cst = arith.constant dense<0.000000e+00> : vector<512x32xf32>
    %2 = tpu.matmul %0, %1, %cst {dimension_numbers = #tpu.dot_dimension_numbers<[1], [0], [0], [1], [0, 0, 1, 1], [], []>} : vector<512x32xbf16>, vector<32x32xbf16>, vector<512x32xf32> -> vector<512x32xf32>
    %c0_3 = arith.constant 0 : index
    %c0_4 = arith.constant 0 : index
    %3 = vector.load %arg3[%c0_3, %c0_4] : memref<1x32xf32, #tpu.memory_space<vmem>>, vector<1x32xf32>
    %4 = vector.broadcast %3 : vector<1x32xf32> to vector<512x32xf32>
    %5 = arith.addf %2, %4 : vector<512x32xf32>
    %6 = arith.truncf %5 : vector<512x32xf32> to vector<512x32xbf16>
    %c0_5 = arith.constant 0 : index
    %c0_6 = arith.constant 0 : index
    %7 = vector.load %arg4[%c0_5, %c0_6] : memref<512x32xbf16, #tpu.memory_space<vmem>>, vector<512x32xbf16>
    tpu.vector_store %arg4[%c0_5, %c0_6], %6 {strides = array<i32>} : memref<512x32xbf16, #tpu.memory_space<vmem>>, vector<512x32xbf16>,
    return
  }
  func.func @transform_0(%arg0: i32) -> (i32, i32) {
    %c0_i32 = arith.constant 0 : i32
    %c0_i32_0 = arith.constant 0 : i32
    return %arg0, %c0_i32 : i32, i32
  }
  func.func @transform_1(%arg0: i32) -> (i32, i32) {
    %c0_i32 = arith.constant 0 : i32
    %c0_i32_0 = arith.constant 0 : i32
    %c0_i32_1 = arith.constant 0 : i32
    return %c0_i32, %c0_i32_0 : i32, i32
  }
  func.func @transform_2(%arg0: i32) -> (i32, i32) {
    %c0_i32 = arith.constant 0 : i32
    %c0_i32_0 = arith.constant 0 : i32
    %c0_i32_1 = arith.constant 0 : i32
    return %c0_i32, %c0_i32_0 : i32, i32
  }
  func.func @transform_3(%arg0: i32) -> (i32, i32) {
    %c0_i32 = arith.constant 0 : i32
    %c0_i32_0 = arith.constant 0 : i32
    return %arg0, %c0_i32 : i32, i32
  }
}

</mosaic_0001>

<llo_original>
// kernel: conv2d.1
$region0: #{conv2d.1}
  #allocation0 [shape = 'u32[]', space=smem, size = 0x4, offset = 0x4, fixed_abs, tag = 'smem constant byte address 0x4 - core index']
  #allocation1 [shape = 'u32[144,128]{1,0:T(1,128)}', space=vmem, size = 0x12000, scoped, tag = 'internal scratch']
  %s0 = inlined_call_operand.vmem [shape: bf16[3584,32], index: 0, kind: input, shape index: {}]
  %s1 = inlined_call_operand.vmem [shape: bf16[32,32], index: 1, kind: input, shape index: {}]
  %s2 = inlined_call_operand.vmem [shape: f32[1,32], index: 2, kind: input, shape index: {}]
  %s3 = inlined_call_operand.hbm [shape: bf16[3584,32], index: 3, kind: output, shape index: {}]
  %s4 = sld [smem:[#allocation0]]
  $region45: #{conv2d.1} parent=0
    _
  %s6 = ssub.s32 1, %s4
  %s7 = scalar_select 0, %s6, %s4
  $region1: #{conv2d.1} parent=0
    #allocation2 [shape = 'u8[262144]{0}', space=vmem, size = 0x40000, scoped, tag = 'output window, operand 0']
    #allocation3 [shape = 's32[2]{0}', space=sflag, size = 0x8, scoped, tag = 'scoped memory for conv2d.1']
    %8 = vsyncpa [#allocation3], 0
    %s9 = scalar_lea.sflag [#allocation3], 1
    %10 = vsyncpa %s9, 0
    loop: start=0, step=1, limit=9
    $region2: #{conv2d.1} parent=1 // loop_pre_header
      _
    $region3: #{conv2d.1} parent=1 // loop_header
      %s12 = sphi 0, %s16
      %p13 = scmp.ge.s32.totalorder %s12, 9
      %s22 = sphi 0, %s24
      %s25 = sphi 0, %s22
      %s26 = sphi 0, %s25
      %s42 = sphi 0, %s26
      %s46 = sphi 0, %s46
      %s48 = sphi 0, %s46
      %s49 = sphi 0, %s48
      %s63 = sphi 0, %s49
      %s67 = sphi 0, %s67
      %s69 = sphi 0, %s67
      %s70 = sphi 0, %s69
      %s84 = sphi 0, %s70
      %s90 = sphi 0, %s92
      %s93 = sphi 0, %s90
      %s94 = sphi 0, %s93
      %s110 = sphi 0, %s94
    $region4: #{conv2d.1} parent=1 // loop_header_branch
      %15 = sbr.rel (%p13) target = $region8
    $region5: #{conv2d.1} parent=1 // loop_body
      %s17 = ssub.s32 %s12, 1
      %s18 = ssub.s32 %s12, 2
      %s19 = sadd.s32 %s12, 1
      %s20 = ssub.s32 %s12, %s19
      %p21 = scmp.eq.s32.totalorder %s20, 0
      %s23 = sadd.s32 %s22, 1
      %s24 = scalar_select %p21, %s22, %s23
      %p27 = pneg %p21
      %p28 = scmp.eq.s32.totalorder %s12, 6
      %p29 = por %p27, %p28
      %p30 = scmp.ne.s32.totalorder %s22, %s25
      %p31 = scmp.eq.s32.totalorder %s12, 0
      %p32 = por %p30, %p31
      %p33 = scmp.ne.s32.totalorder %s22, %s25
      %p34 = scmp.eq.s32.totalorder %s17, 6
      %p35 = por %p33, %p34
      %p36 = scmp.ne.s32.totalorder %s25, %s26
      %p37 = scmp.eq.s32.totalorder %s17, 0
      %p38 = por %p36, %p37
      %p39 = scmp.ne.s32.totalorder %s25, %s26
      %p40 = scmp.eq.s32.totalorder %s18, 6
      %p41 = por %p39, %p40
      %p43 = scmp.ne.s32.totalorder %s26, %s42
      %p44 = scmp.eq.s32.totalorder %s18, 0
      %p45 = por %p43, %p44
      %s47 = sadd.s32 %s46, 1
      %p50 = scmp.eq.s32.totalorder %s12, 6
      %p51 = scmp.ne.s32.totalorder %s46, %s48
      %p52 = scmp.eq.s32.totalorder %s12, 0
      %p53 = por %p51, %p52
      %p54 = scmp.ne.s32.totalorder %s46, %s48
      %p55 = scmp.eq.s32.totalorder %s17, 6
      %p56 = por %p54, %p55
      %p57 = scmp.ne.s32.totalorder %s48, %s49
      %p58 = scmp.eq.s32.totalorder %s17, 0
      %p59 = por %p57, %p58
      %p60 = scmp.ne.s32.totalorder %s48, %s49
      %p61 = scmp.eq.s32.totalorder %s18, 6
      %p62 = por %p60, %p61
      %p64 = scmp.ne.s32.totalorder %s49, %s63
      %p65 = scmp.eq.s32.totalorder %s18, 0
      %p66 = por %p64, %p65
      %s68 = sadd.s32 %s67, 1
      %p71 = scmp.eq.s32.totalorder %s12, 6
      %p72 = scmp.ne.s32.totalorder %s67, %s69
      %p73 = scmp.eq.s32.totalorder %s12, 0
      %p74 = por %p72, %p73
      %p75 = scmp.ne.s32.totalorder %s67, %s69
      %p76 = scmp.eq.s32.totalorder %s17, 6
      %p77 = por %p75, %p76
      %p78 = scmp.ne.s32.totalorder %s69, %s70
      %p79 = scmp.eq.s32.totalorder %s17, 0
      %p80 = por %p78, %p79
      %p81 = scmp.ne.s32.totalorder %s69, %s70
      %p82 = scmp.eq.s32.totalorder %s18, 6
      %p83 = por %p81, %p82
      %p85 = scmp.ne.s32.totalorder %s70, %s84
      %p86 = scmp.eq.s32.totalorder %s18, 0
      %p87 = por %p85, %p86
      %s88 = ssub.s32 %s12, %s19
      %p89 = scmp.eq.s32.totalorder %s88, 0
      %s91 = sadd.s32 %s90, 1
      %s92 = scalar_select %p89, %s90, %s91
      %p95 = pneg %p89
      %p96 = scmp.eq.s32.totalorder %s12, 6
      %p97 = por %p95, %p96
      %p98 = scmp.ne.s32.totalorder %s90, %s93
      %p99 = scmp.eq.s32.totalorder %s12, 0
      %p100 = por %p98, %p99
      %p101 = scmp.ne.s32.totalorder %s90, %s93
      %p102 = scmp.eq.s32.totalorder %s17, 6
      %p103 = por %p101, %p102
      %p104 = scmp.ne.s32.totalorder %s93, %s94
      %p105 = scmp.eq.s32.totalorder %s17, 0
      %p106 = por %p104, %p105
      %p107 = scmp.ne.s32.totalorder %s93, %s94
      %p108 = scmp.eq.s32.totalorder %s18, 6
      %p109 = por %p107, %p108
      %p111 = scmp.ne.s32.totalorder %s94, %s110
      %p112 = scmp.eq.s32.totalorder %s18, 0
      %p113 = por %p111, %p112
      %p114 = scmp.le.s32.totalorder 1, %s12
      %p115 = scmp.lt.s32.totalorder %s12, 8
      %p116 = pnand %p114, %p115
      %p117 = pneg %p116
      // Predicated region
      $region9: #{conv2d.1} parent=5 // pred_check
        _
      $region10: #{conv2d.1} parent=5 // pred_check_branch
        %119 = sbr.rel (%p116) target = $region12
      $region11: #{conv2d.1} parent=5 // pred_region
        %s120 = ssub.s32 %s12, 1
        // Predicated region
        $region13: #{conv2d.1} parent=11 // pred_check
          %p121 = pneg %p59
        $region14: #{conv2d.1} parent=11 // pred_check_branch
          %123 = sbr.rel (%p121) target = $region16
        $region15: #{conv2d.1} parent=11 // pred_region
          _
        $region16: #{conv2d.1} parent=11 // pred_fallthru
          _
        // Predicated region
        $region17: #{conv2d.1} parent=11 // pred_check
          %p124 = pneg %p80
        $region18: #{conv2d.1} parent=11 // pred_check_branch
          %126 = sbr.rel (%p124) target = $region20
        $region19: #{conv2d.1} parent=11 // pred_region
          _
        $region20: #{conv2d.1} parent=11 // pred_fallthru
          _
      $region12: #{conv2d.1} parent=5 // pred_fallthru
        _
      %p127 = scmp.lt.s32.totalorder %s12, 7
      // Predicated region
      $region21: #{conv2d.1} parent=5 // pred_check
        %p128 = pneg %p127
      $region22: #{conv2d.1} parent=5 // pred_check_branch
        %130 = sbr.rel (%p128) target = $region24
      $region23: #{conv2d.1} parent=5 // pred_region
        // Predicated region
        $region25: #{conv2d.1} parent=23 // pred_check
          %p131 = pneg %p32
        $region26: #{conv2d.1} parent=23 // pred_check_branch
          %133 = sbr.rel (%p131) target = $region28
        $region27: #{conv2d.1} parent=23 // pred_region
          %s134 = smul.u32 64, %s12
          %p135 = scmp.lt.s32.totalorder %s134, 447
          %s136 = scalar_select %p135, %s134, 447
          %s137 = smul.addr %s136, 4
          %s138 = scalar_lea.vmem %s0, %s137
          %s139 = smul.u32 64, %s12
        $region28: #{conv2d.1} parent=23 // pred_fallthru
          _
      $region24: #{conv2d.1} parent=5 // pred_fallthru
        _
      %p140 = scmp.le.s32.totalorder 1, %s12
      %p141 = scmp.lt.s32.totalorder %s12, 8
      %p142 = pnand %p140, %p141
      %p143 = pneg %p142
      // Predicated region
      $region29: #{conv2d.1} parent=5 // pred_check
        _
      $region30: #{conv2d.1} parent=5 // pred_check_branch
        %145 = sbr.rel (%p142) target = $region32
      $region31: #{conv2d.1} parent=5 // pred_region
        %s146 = ssub.s32 %s12, 1
        %s147 = smul.u32 64, %s17
        %p148 = scmp.lt.s32.totalorder %s147, 447
        %s149 = scalar_select %p148, %s147, 447
        %s150 = smul.addr %s149, 4
        %s151 = scalar_lea.vmem %s0, %s150
        %p152 = pneg %p38
        %p153 = pneg %p35
        %p154 = pneg %p59
        %p155 = pneg %p56
        %p156 = pneg %p80
        %p157 = pneg %p77
        %p158 = pneg %p106
        %p159 = pneg %p103
        %s160 = sand.u32 %s93, 1
        %s161 = scalar_lea.sflag [#allocation3], %s160
        %s162 = sand.u32 %s93, 1
        %s163 = smul.addr %s162, 256
        %s164 = scalar_lea.vmem [#allocation2], %s163
        %s165 = smul.u32 64, %s17
        %p166 = scmp.lt.s32.totalorder %s165, 447
        %s167 = scalar_select %p166, %s165, 447
        %s168 = smul.addr %s167, 4
        %s169 = scalar_lea.vmem %s0, %s168
        %s170 = smul.u32 64, %s17
        %s171 = smul.u32 64, %s17
        %v173 = vld [vmem:[%s169] sm:$0xf]
        %v174 = vld [vmem:[%s169 + $0x4] sm:$0xf]
        %v175 = vld [vmem:[%s169 + $0x8] sm:$0xf]
        %v176 = vld [vmem:[%s169 + $0xc] sm:$0xf]
        %v177 = vld [vmem:[%s169 + $0x10] sm:$0xf]
        %v178 = vld [vmem:[%s169 + $0x14] sm:$0xf]
        %v179 = vld [vmem:[%s169 + $0x18] sm:$0xf]
        %v180 = vld [vmem:[%s169 + $0x1c] sm:$0xf]
        %v181 = vld [vmem:[%s169 + $0x20] sm:$0xf]
        %v182 = vld [vmem:[%s169 + $0x24] sm:$0xf]
        %v183 = vld [vmem:[%s169 + $0x28] sm:$0xf]
        %v184 = vld [vmem:[%s169 + $0x2c] sm:$0xf]
        %v185 = vld [vmem:[%s169 + $0x30] sm:$0xf]
        %v186 = vld [vmem:[%s169 + $0x34] sm:$0xf]
        %v187 = vld [vmem:[%s169 + $0x38] sm:$0xf]
        %v188 = vld [vmem:[%s169 + $0x3c] sm:$0xf]
        %v189 = vld [vmem:[%s169 + $0x40] sm:$0xf]
        %v190 = vld [vmem:[%s169 + $0x44] sm:$0xf]
        %v191 = vld [vmem:[%s169 + $0x48] sm:$0xf]
        %v192 = vld [vmem:[%s169 + $0x4c] sm:$0xf]
        %v193 = vld [vmem:[%s169 + $0x50] sm:$0xf]
        %v194 = vld [vmem:[%s169 + $0x54] sm:$0xf]
        %v195 = vld [vmem:[%s169 + $0x58] sm:$0xf]
        %v196 = vld [vmem:[%s169 + $0x5c] sm:$0xf]
        %v197 = vld [vmem:[%s169 + $0x60] sm:$0xf]
        %v198 = vld [vmem:[%s169 + $0x64] sm:$0xf]
        %v199 = vld [vmem:[%s169 + $0x68] sm:$0xf]
        %v200 = vld [vmem:[%s169 + $0x6c] sm:$0xf]
        %v201 = vld [vmem:[%s169 + $0x70] sm:$0xf]
        %v202 = vld [vmem:[%s169 + $0x74] sm:$0xf]
        %v203 = vld [vmem:[%s169 + $0x78] sm:$0xf]
        %v204 = vld [vmem:[%s169 + $0x7c] sm:$0xf]
        %v205 = vld [vmem:[%s169 + $0x80] sm:$0xf]
        %v206 = vld [vmem:[%s169 + $0x84] sm:$0xf]
        %v207 = vld [vmem:[%s169 + $0x88] sm:$0xf]
        %v208 = vld [vmem:[%s169 + $0x8c] sm:$0xf]
        %v209 = vld [vmem:[%s169 + $0x90] sm:$0xf]
        %v210 = vld [vmem:[%s169 + $0x94] sm:$0xf]
        %v211 = vld [vmem:[%s169 + $0x98] sm:$0xf]
        %v212 = vld [vmem:[%s169 + $0x9c] sm:$0xf]
        %v213 = vld [vmem:[%s169 + $0xa0] sm:$0xf]
        %v214 = vld [vmem:[%s169 + $0xa4] sm:$0xf]
        %v215 = vld [vmem:[%s169 + $0xa8] sm:$0xf]
        %v216 = vld [vmem:[%s169 + $0xac] sm:$0xf]
        %v217 = vld [vmem:[%s169 + $0xb0] sm:$0xf]
        %v218 = vld [vmem:[%s169 + $0xb4] sm:$0xf]
        %v219 = vld [vmem:[%s169 + $0xb8] sm:$0xf]
        %v220 = vld [vmem:[%s169 + $0xbc] sm:$0xf]
        %v221 = vld [vmem:[%s169 + $0xc0] sm:$0xf]
        %v222 = vld [vmem:[%s169 + $0xc4] sm:$0xf]
        %v223 = vld [vmem:[%s169 + $0xc8] sm:$0xf]
        %v224 = vld [vmem:[%s169 + $0xcc] sm:$0xf]
        %v225 = vld [vmem:[%s169 + $0xd0] sm:$0xf]
        %v226 = vld [vmem:[%s169 + $0xd4] sm:$0xf]
        %v227 = vld [vmem:[%s169 + $0xd8] sm:$0xf]
        %v228 = vld [vmem:[%s169 + $0xdc] sm:$0xf]
        %v229 = vld [vmem:[%s169 + $0xe0] sm:$0xf]
        %v230 = vld [vmem:[%s169 + $0xe4] sm:$0xf]
        %v231 = vld [vmem:[%s169 + $0xe8] sm:$0xf]
        %v232 = vld [vmem:[%s169 + $0xec] sm:$0xf]
        %v233 = vld [vmem:[%s169 + $0xf0] sm:$0xf]
        %v234 = vld [vmem:[%s169 + $0xf4] sm:$0xf]
        %v235 = vld [vmem:[%s169 + $0xf8] sm:$0xf]
        %v236 = vld [vmem:[%s169 + $0xfc] sm:$0xf]
        %v237 = vld [vmem:[%s1] sm:$0xf]
        %v238 = vld [vmem:[%s1 + $0x4] sm:$0xf]
        %v239 = vld [vmem:[%s1 + $0x8] sm:$0xf]
        %v240 = vld [vmem:[%s1 + $0xc] sm:$0xf]
        %v241 = vld [vmem:[%s2] sm:$0x1]
        %v243 = vlaneseq
        %v244 = vshrl.u32 %v243, 7
        %v245 = vsub.s32 0, %v244
        %v246 = vrot.slane %v241, %v245
        %v312 = vunpack.c.l.b16 %v173
        %v313 = vunpack.c.l.b16 %v174
        %v314 = vunpack.c.l.b16 %v175
        %v315 = vunpack.c.l.b16 %v176
        %v316 = vunpack.c.l.b16 %v177
        %v317 = vunpack.c.l.b16 %v178
        %v318 = vunpack.c.l.b16 %v179
        %v319 = vunpack.c.l.b16 %v180
        %v320 = vunpack.c.l.b16 %v181
        %v321 = vunpack.c.l.b16 %v182
        %v322 = vunpack.c.l.b16 %v183
        %v323 = vunpack.c.l.b16 %v184
        %v324 = vunpack.c.l.b16 %v185
        %v325 = vunpack.c.l.b16 %v186
        %v326 = vunpack.c.l.b16 %v187
        %v327 = vunpack.c.l.b16 %v188
        %v328 = vunpack.c.l.b16 %v189
        %v329 = vunpack.c.l.b16 %v190
        %v330 = vunpack.c.l.b16 %v191
        %v331 = vunpack.c.l.b16 %v192
        %v332 = vunpack.c.l.b16 %v193
        %v333 = vunpack.c.l.b16 %v194
        %v334 = vunpack.c.l.b16 %v195
        %v335 = vunpack.c.l.b16 %v196
        %v336 = vunpack.c.l.b16 %v197
        %v337 = vunpack.c.l.b16 %v198
        %v338 = vunpack.c.l.b16 %v199
        %v339 = vunpack.c.l.b16 %v200
        %v340 = vunpack.c.l.b16 %v201
        %v341 = vunpack.c.l.b16 %v202
        %v342 = vunpack.c.l.b16 %v203
        %v343 = vunpack.c.l.b16 %v204
        %v344 = vunpack.c.l.b16 %v205
        %v345 = vunpack.c.l.b16 %v206
        %v346 = vunpack.c.l.b16 %v207
        %v347 = vunpack.c.l.b16 %v208
        %v348 = vunpack.c.l.b16 %v209
        %v349 = vunpack.c.l.b16 %v210
        %v350 = vunpack.c.l.b16 %v211
        %v351 = vunpack.c.l.b16 %v212
        %v352 = vunpack.c.l.b16 %v213
        %v353 = vunpack.c.l.b16 %v214
        %v354 = vunpack.c.l.b16 %v215
        %v355 = vunpack.c.l.b16 %v216
        %v356 = vunpack.c.l.b16 %v217
        %v357 = vunpack.c.l.b16 %v218
        %v358 = vunpack.c.l.b16 %v219
        %v359 = vunpack.c.l.b16 %v220
        %v360 = vunpack.c.l.b16 %v221
        %v361 = vunpack.c.l.b16 %v222
        %v362 = vunpack.c.l.b16 %v223
        %v363 = vunpack.c.l.b16 %v224
        %v364 = vunpack.c.l.b16 %v225
        %v365 = vunpack.c.l.b16 %v226
        %v366 = vunpack.c.l.b16 %v227
        %v367 = vunpack.c.l.b16 %v228
        %v368 = vunpack.c.l.b16 %v229
        %v369 = vunpack.c.l.b16 %v230
        %v370 = vunpack.c.l.b16 %v231
        %v371 = vunpack.c.l.b16 %v232
        %v372 = vunpack.c.l.b16 %v233
        %v373 = vunpack.c.l.b16 %v234
        %v374 = vunpack.c.l.b16 %v235
        %v375 = vunpack.c.l.b16 %v236
        %v376 = vpack.c.b16 %v313, %v312
        %v377 = vpack.c.b16 %v315, %v314
        %v378 = vpack.c.b16 %v317, %v316
        %v379 = vpack.c.b16 %v319, %v318
        %v380 = vpack.c.b16 %v321, %v320
        %v381 = vpack.c.b16 %v323, %v322
        %v382 = vpack.c.b16 %v325, %v324
        %v383 = vpack.c.b16 %v327, %v326
        %v384 = vpack.c.b16 %v329, %v328
        %v385 = vpack.c.b16 %v331, %v330
        %v386 = vpack.c.b16 %v333, %v332
        %v387 = vpack.c.b16 %v335, %v334
        %v388 = vpack.c.b16 %v337, %v336
        %v389 = vpack.c.b16 %v339, %v338
        %v390 = vpack.c.b16 %v341, %v340
        %v391 = vpack.c.b16 %v343, %v342
        %v392 = vpack.c.b16 %v345, %v344
        %v393 = vpack.c.b16 %v347, %v346
        %v394 = vpack.c.b16 %v349, %v348
        %v395 = vpack.c.b16 %v351, %v350
        %v396 = vpack.c.b16 %v353, %v352
        %v397 = vpack.c.b16 %v355, %v354
        %v398 = vpack.c.b16 %v357, %v356
        %v399 = vpack.c.b16 %v359, %v358
        %v400 = vpack.c.b16 %v361, %v360
        %v401 = vpack.c.b16 %v363, %v362
        %v402 = vpack.c.b16 %v365, %v364
        %v403 = vpack.c.b16 %v367, %v366
        %v404 = vpack.c.b16 %v369, %v368
        %v405 = vpack.c.b16 %v371, %v370
        %v406 = vpack.c.b16 %v373, %v372
        %v407 = vpack.c.b16 %v375, %v374
        %v412 = vunpack.c.l.b16 %v237
        %v413 = vunpack.c.l.b16 %v238
        %v414 = vunpack.c.l.b16 %v239
        %v415 = vunpack.c.l.b16 %v240
        %v416 = vpack.c.b16 %v413, %v412
        %v417 = vpack.c.b16 %v415, %v414
        %vm420 = vcmask 261120
        %v422 = vsel %vm420, %v376, 0
        %v425 = vsel %vm420, %v377, 0
        %v428 = vsel %vm420, %v378, 0
        %v431 = vsel %vm420, %v379, 0
        %v434 = vsel %vm420, %v380, 0
        %v437 = vsel %vm420, %v381, 0
        %v440 = vsel %vm420, %v382, 0
        %v443 = vsel %vm420, %v383, 0
        %v446 = vsel %vm420, %v384, 0
        %v449 = vsel %vm420, %v385, 0
        %v452 = vsel %vm420, %v386, 0
        %v455 = vsel %vm420, %v387, 0
        %v458 = vsel %vm420, %v388, 0
        %v461 = vsel %vm420, %v389, 0
        %v464 = vsel %vm420, %v390, 0
        %v467 = vsel %vm420, %v391, 0
        %v470 = vsel %vm420, %v392, 0
        %v473 = vsel %vm420, %v393, 0
        %v476 = vsel %vm420, %v394, 0
        %v479 = vsel %vm420, %v395, 0
        %v482 = vsel %vm420, %v396, 0
        %v485 = vsel %vm420, %v397, 0
        %v488 = vsel %vm420, %v398, 0
        %v491 = vsel %vm420, %v399, 0
        %v494 = vsel %vm420, %v400, 0
        %v497 = vsel %vm420, %v401, 0
        %v500 = vsel %vm420, %v402, 0
        %v503 = vsel %vm420, %v403, 0
        %v506 = vsel %vm420, %v404, 0
        %v509 = vsel %vm420, %v405, 0
        %v512 = vsel %vm420, %v406, 0
        %v515 = vsel %vm420, %v407, 0
        %517 = vmatprep.subr.bf16.mxu0 0
        %518 = vmatpush1.bf16.msra.mxu0 0
        %519 = vmatprep.subr.bf16.mxu0 0
        %520 = vmatpush1.bf16.msra.mxu0 0
        %521 = vmatprep.subr.bf16.mxu0 0
        %522 = vmatpush1.bf16.msra.mxu0 0
        %523 = vmatprep.subr.bf16.mxu0 0
        %524 = vmatpush1.bf16.msra.mxu0 0
        %525 = vmatprep.subr.bf16.mxu0 0
        %526 = vmatpush1.bf16.msra.mxu0 0
        %527 = vmatprep.subr.bf16.mxu0 0
        %528 = vmatpush1.bf16.msra.mxu0 0
        %529 = vmatprep.subr.bf16.mxu0 0
        %530 = vmatpush1.bf16.msra.mxu0 %v417
        %531 = vmatprep.subr.bf16.mxu0 0
        %532 = vmatpush1.bf16.msra.mxu0 %v416
        %533 = vmatprep.subr.bf16.mxu0 0
        %534 = vmatpush2.bf16.msra.mxu0 0
        %535 = vmatprep.subr.bf16.mxu0 0
        %536 = vmatpush2.bf16.msra.mxu0 0
        %537 = vmatprep.subr.bf16.mxu0 0
        %538 = vmatpush2.bf16.msra.mxu0 0
        %539 = vmatprep.subr.bf16.mxu0 0
        %540 = vmatpush2.bf16.msra.mxu0 0
        %541 = vmatprep.subr.bf16.mxu0 0
        %542 = vmatpush2.bf16.msra.mxu0 0
        %543 = vmatprep.subr.bf16.mxu0 0
        %544 = vmatpush2.bf16.msra.mxu0 0
        %545 = vmatprep.subr.bf16.mxu0 0
        %546 = vmatpush2.bf16.msra.mxu0 0
        %547 = vmatprep.subr.bf16.mxu0 0
        %548 = vmatpush2.bf16.msra.mxu0 0
        %549 = vmatprep.mubr.bf16.mxu0 0
        %550 = vmatmul.mubr.bf16.gmra.mxu0 %v422
        %v551 = vpop.f32.mrf.mxu0
        %v552 = vadd.f32 %v246, %v551
        %v553 = vpop.f32.mrf.mxu0
        %v554 = vpop.f32.mrf.mxu0
        %v555 = vadd.f32 %v246, %v554
        %v556 = vpop.f32.mrf.mxu0
        %557 = vmatprep.mubr.bf16.mxu0 0
        %558 = vmatmul.mubr.bf16.gmra.mxu0 %v425
        %v559 = vpop.f32.mrf.mxu0
        %v560 = vadd.f32 %v246, %v559
        %v561 = vpop.f32.mrf.mxu0
        %v562 = vpop.f32.mrf.mxu0
        %v563 = vadd.f32 %v246, %v562
        %v564 = vpop.f32.mrf.mxu0
        %565 = vmatprep.mubr.bf16.mxu0 0
        %566 = vmatmul.mubr.bf16.gmra.mxu0 %v428
        %v567 = vpop.f32.mrf.mxu0
        %v568 = vadd.f32 %v246, %v567
        %v569 = vpop.f32.mrf.mxu0
        %v570 = vpop.f32.mrf.mxu0
        %v571 = vadd.f32 %v246, %v570
        %v572 = vpop.f32.mrf.mxu0
        %573 = vmatprep.mubr.bf16.mxu0 0
        %574 = vmatmul.mubr.bf16.gmra.mxu0 %v431
        %v575 = vpop.f32.mrf.mxu0
        %v576 = vadd.f32 %v246, %v575
        %v577 = vpop.f32.mrf.mxu0
        %v578 = vpop.f32.mrf.mxu0
        %v579 = vadd.f32 %v246, %v578
        %v580 = vpop.f32.mrf.mxu0
        %581 = vmatprep.mubr.bf16.mxu0 0
        %582 = vmatmul.mubr.bf16.gmra.mxu0 %v434
        %v583 = vpop.f32.mrf.mxu0
        %v584 = vadd.f32 %v246, %v583
        %v585 = vpop.f32.mrf.mxu0
        %v586 = vpop.f32.mrf.mxu0
        %v587 = vadd.f32 %v246, %v586
        %v588 = vpop.f32.mrf.mxu0
        %589 = vmatprep.mubr.bf16.mxu0 0
        %590 = vmatmul.mubr.bf16.gmra.mxu0 %v437
        %v591 = vpop.f32.mrf.mxu0
        %v592 = vadd.f32 %v246, %v591
        %v593 = vpop.f32.mrf.mxu0
        %v594 = vpop.f32.mrf.mxu0
        %v595 = vadd.f32 %v246, %v594
        %v596 = vpop.f32.mrf.mxu0
        %597 = vmatprep.mubr.bf16.mxu0 0
        %598 = vmatmul.mubr.bf16.gmra.mxu0 %v440
        %v599 = vpop.f32.mrf.mxu0
        %v600 = vadd.f32 %v246, %v599
        %v601 = vpop.f32.mrf.mxu0
        %v602 = vpop.f32.mrf.mxu0
        %v603 = vadd.f32 %v246, %v602
        %v604 = vpop.f32.mrf.mxu0
        %605 = vmatprep.mubr.bf16.mxu0 0
        %606 = vmatmul.mubr.bf16.gmra.mxu0 %v443
        %v607 = vpop.f32.mrf.mxu0
        %v608 = vadd.f32 %v246, %v607
        %v609 = vpop.f32.mrf.mxu0
        %v610 = vpop.f32.mrf.mxu0
        %v611 = vadd.f32 %v246, %v610
        %v612 = vpop.f32.mrf.mxu0
        %613 = vmatprep.mubr.bf16.mxu0 0
        %614 = vmatmul.mubr.bf16.gmra.mxu0 %v446
        %v615 = vpop.f32.mrf.mxu0
        %v616 = vadd.f32 %v246, %v615
        %v617 = vpop.f32.mrf.mxu0
        %v618 = vpop.f32.mrf.mxu0
        %v619 = vadd.f32 %v246, %v618
        %v620 = vpop.f32.mrf.mxu0
        %621 = vmatprep.mubr.bf16.mxu0 0
        %622 = vmatmul.mubr.bf16.gmra.mxu0 %v449
        %v623 = vpop.f32.mrf.mxu0
        %v624 = vadd.f32 %v246, %v623
        %v625 = vpop.f32.mrf.mxu0
        %v626 = vpop.f32.mrf.mxu0
        %v627 = vadd.f32 %v246, %v626
        %v628 = vpop.f32.mrf.mxu0
        %629 = vmatprep.mubr.bf16.mxu0 0
        %630 = vmatmul.mubr.bf16.gmra.mxu0 %v452
        %v631 = vpop.f32.mrf.mxu0
        %v632 = vadd.f32 %v246, %v631
        %v633 = vpop.f32.mrf.mxu0
        %v634 = vpop.f32.mrf.mxu0
        %v635 = vadd.f32 %v246, %v634
        %v636 = vpop.f32.mrf.mxu0
        %637 = vmatprep.mubr.bf16.mxu0 0
        %638 = vmatmul.mubr.bf16.gmra.mxu0 %v455
        %v639 = vpop.f32.mrf.mxu0
        %v640 = vadd.f32 %v246, %v639
        %v641 = vpop.f32.mrf.mxu0
        %v642 = vpop.f32.mrf.mxu0
        %v643 = vadd.f32 %v246, %v642
        %v644 = vpop.f32.mrf.mxu0
        %645 = vmatprep.mubr.bf16.mxu0 0
        %646 = vmatmul.mubr.bf16.gmra.mxu0 %v458
        %v647 = vpop.f32.mrf.mxu0
        %v648 = vadd.f32 %v246, %v647
        %v649 = vpop.f32.mrf.mxu0
        %v650 = vpop.f32.mrf.mxu0
        %v651 = vadd.f32 %v246, %v650
        %v652 = vpop.f32.mrf.mxu0
        %653 = vmatprep.mubr.bf16.mxu0 0
        %654 = vmatmul.mubr.bf16.gmra.mxu0 %v461
        %v655 = vpop.f32.mrf.mxu0
        %v656 = vadd.f32 %v246, %v655
        %v657 = vpop.f32.mrf.mxu0
        %v658 = vpop.f32.mrf.mxu0
        %v659 = vadd.f32 %v246, %v658
        %v660 = vpop.f32.mrf.mxu0
        %661 = vmatprep.mubr.bf16.mxu0 0
        %662 = vmatmul.mubr.bf16.gmra.mxu0 %v464
        %v663 = vpop.f32.mrf.mxu0
        %v664 = vadd.f32 %v246, %v663
        %v665 = vpop.f32.mrf.mxu0
        %v666 = vpop.f32.mrf.mxu0
        %v667 = vadd.f32 %v246, %v666
        %v668 = vpop.f32.mrf.mxu0
        %669 = vmatprep.mubr.bf16.mxu0 0
        %670 = vmatmul.mubr.bf16.gmra.mxu0 %v467
        %v671 = vpop.f32.mrf.mxu0
        %v672 = vadd.f32 %v246, %v671
        %v673 = vpop.f32.mrf.mxu0
        %v674 = vpop.f32.mrf.mxu0
        %v675 = vadd.f32 %v246, %v674
        %v676 = vpop.f32.mrf.mxu0
        %677 = vmatprep.mubr.bf16.mxu0 0
        %678 = vmatmul.mubr.bf16.gmra.mxu0 %v470
        %v679 = vpop.f32.mrf.mxu0
        %v680 = vadd.f32 %v246, %v679
        %v681 = vpop.f32.mrf.mxu0
        %v682 = vpop.f32.mrf.mxu0
        %v683 = vadd.f32 %v246, %v682
        %v684 = vpop.f32.mrf.mxu0
        %685 = vmatprep.mubr.bf16.mxu0 0
        %686 = vmatmul.mubr.bf16.gmra.mxu0 %v473
        %v687 = vpop.f32.mrf.mxu0
        %v688 = vadd.f32 %v246, %v687
        %v689 = vpop.f32.mrf.mxu0
        %v690 = vpop.f32.mrf.mxu0
        %v691 = vadd.f32 %v246, %v690
        %v692 = vpop.f32.mrf.mxu0
        %693 = vmatprep.mubr.bf16.mxu0 0
        %694 = vmatmul.mubr.bf16.gmra.mxu0 %v476
        %v695 = vpop.f32.mrf.mxu0
        %v696 = vadd.f32 %v246, %v695
        %v697 = vpop.f32.mrf.mxu0
        %v698 = vpop.f32.mrf.mxu0
        %v699 = vadd.f32 %v246, %v698
        %v700 = vpop.f32.mrf.mxu0
        %701 = vmatprep.mubr.bf16.mxu0 0
        %702 = vmatmul.mubr.bf16.gmra.mxu0 %v479
        %v703 = vpop.f32.mrf.mxu0
        %v704 = vadd.f32 %v246, %v703
        %v705 = vpop.f32.mrf.mxu0
        %v706 = vpop.f32.mrf.mxu0
        %v707 = vadd.f32 %v246, %v706
        %v708 = vpop.f32.mrf.mxu0
        %709 = vmatprep.mubr.bf16.mxu0 0
        %710 = vmatmul.mubr.bf16.gmra.mxu0 %v482
        %v711 = vpop.f32.mrf.mxu0
        %v712 = vadd.f32 %v246, %v711
        %v713 = vpop.f32.mrf.mxu0
        %v714 = vpop.f32.mrf.mxu0
        %v715 = vadd.f32 %v246, %v714
        %v716 = vpop.f32.mrf.mxu0
        %717 = vmatprep.mubr.bf16.mxu0 0
        %718 = vmatmul.mubr.bf16.gmra.mxu0 %v485
        %v719 = vpop.f32.mrf.mxu0
        %v720 = vadd.f32 %v246, %v719
        %v721 = vpop.f32.mrf.mxu0
        %v722 = vpop.f32.mrf.mxu0
        %v723 = vadd.f32 %v246, %v722
        %v724 = vpop.f32.mrf.mxu0
        %725 = vmatprep.mubr.bf16.mxu0 0
        %726 = vmatmul.mubr.bf16.gmra.mxu0 %v488
        %v727 = vpop.f32.mrf.mxu0
        %v728 = vadd.f32 %v246, %v727
        %v729 = vpop.f32.mrf.mxu0
        %v730 = vpop.f32.mrf.mxu0
        %v731 = vadd.f32 %v246, %v730
        %v732 = vpop.f32.mrf.mxu0
        %733 = vmatprep.mubr.bf16.mxu0 0
        %734 = vmatmul.mubr.bf16.gmra.mxu0 %v491
        %v735 = vpop.f32.mrf.mxu0
        %v736 = vadd.f32 %v246, %v735
        %v737 = vpop.f32.mrf.mxu0
        %v738 = vpop.f32.mrf.mxu0
        %v739 = vadd.f32 %v246, %v738
        %v740 = vpop.f32.mrf.mxu0
        %741 = vmatprep.mubr.bf16.mxu0 0
        %742 = vmatmul.mubr.bf16.gmra.mxu0 %v494
        %v743 = vpop.f32.mrf.mxu0
        %v744 = vadd.f32 %v246, %v743
        %v745 = vpop.f32.mrf.mxu0
        %v746 = vpop.f32.mrf.mxu0
        %v747 = vadd.f32 %v246, %v746
        %v748 = vpop.f32.mrf.mxu0
        %749 = vmatprep.mubr.bf16.mxu0 0
        %750 = vmatmul.mubr.bf16.gmra.mxu0 %v497
        %v751 = vpop.f32.mrf.mxu0
        %v752 = vadd.f32 %v246, %v751
        %v753 = vpop.f32.mrf.mxu0
        %v754 = vpop.f32.mrf.mxu0
        %v755 = vadd.f32 %v246, %v754
        %v756 = vpop.f32.mrf.mxu0
        %757 = vmatprep.mubr.bf16.mxu0 0
        %758 = vmatmul.mubr.bf16.gmra.mxu0 %v500
        %v759 = vpop.f32.mrf.mxu0
        %v760 = vadd.f32 %v246, %v759
        %v761 = vpop.f32.mrf.mxu0
        %v762 = vpop.f32.mrf.mxu0
        %v763 = vadd.f32 %v246, %v762
        %v764 = vpop.f32.mrf.mxu0
        %765 = vmatprep.mubr.bf16.mxu0 0
        %766 = vmatmul.mubr.bf16.gmra.mxu0 %v503
        %v767 = vpop.f32.mrf.mxu0
        %v768 = vadd.f32 %v246, %v767
        %v769 = vpop.f32.mrf.mxu0
        %v770 = vpop.f32.mrf.mxu0
        %v771 = vadd.f32 %v246, %v770
        %v772 = vpop.f32.mrf.mxu0
        %773 = vmatprep.mubr.bf16.mxu0 0
        %774 = vmatmul.mubr.bf16.gmra.mxu0 %v506
        %v775 = vpop.f32.mrf.mxu0
        %v776 = vadd.f32 %v246, %v775
        %v777 = vpop.f32.mrf.mxu0
        %v778 = vpop.f32.mrf.mxu0
        %v779 = vadd.f32 %v246, %v778
        %v780 = vpop.f32.mrf.mxu0
        %781 = vmatprep.mubr.bf16.mxu0 0
        %782 = vmatmul.mubr.bf16.gmra.mxu0 %v509
        %v783 = vpop.f32.mrf.mxu0
        %v784 = vadd.f32 %v246, %v783
        %v785 = vpop.f32.mrf.mxu0
        %v786 = vpop.f32.mrf.mxu0
        %v787 = vadd.f32 %v246, %v786
        %v788 = vpop.f32.mrf.mxu0
        %789 = vmatprep.mubr.bf16.mxu0 0
        %790 = vmatmul.mubr.bf16.gmra.mxu0 %v512
        %v791 = vpop.f32.mrf.mxu0
        %v792 = vadd.f32 %v246, %v791
        %v793 = vpop.f32.mrf.mxu0
        %v794 = vpop.f32.mrf.mxu0
        %v795 = vadd.f32 %v246, %v794
        %v796 = vpop.f32.mrf.mxu0
        %797 = vmatprep.mubr.bf16.mxu0 0
        %798 = vmatmul.mubr.bf16.gmra.mxu0 %v515
        %v799 = vpop.f32.mrf.mxu0
        %v800 = vadd.f32 %v246, %v799
        %v801 = vpop.f32.mrf.mxu0
        %v802 = vpop.f32.mrf.mxu0
        %v803 = vadd.f32 %v246, %v802
        %v804 = vpop.f32.mrf.mxu0
        %805 = vdwg.mxu0
        %v806 = vpack.c.bf16 %v555, %v552
        %v807 = vpack.c.bf16 %v563, %v560
        %v808 = vpack.c.bf16 %v571, %v568
        %v809 = vpack.c.bf16 %v579, %v576
        %v810 = vpack.c.bf16 %v587, %v584
        %v811 = vpack.c.bf16 %v595, %v592
        %v812 = vpack.c.bf16 %v603, %v600
        %v813 = vpack.c.bf16 %v611, %v608
        %v814 = vpack.c.bf16 %v619, %v616
        %v815 = vpack.c.bf16 %v627, %v624
        %v816 = vpack.c.bf16 %v635, %v632
        %v817 = vpack.c.bf16 %v643, %v640
        %v818 = vpack.c.bf16 %v651, %v648
        %v819 = vpack.c.bf16 %v659, %v656
        %v820 = vpack.c.bf16 %v667, %v664
        %v821 = vpack.c.bf16 %v675, %v672
        %v822 = vpack.c.bf16 %v683, %v680
        %v823 = vpack.c.bf16 %v691, %v688
        %v824 = vpack.c.bf16 %v699, %v696
        %v825 = vpack.c.bf16 %v707, %v704
        %v826 = vpack.c.bf16 %v715, %v712
        %v827 = vpack.c.bf16 %v723, %v720
        %v828 = vpack.c.bf16 %v731, %v728
        %v829 = vpack.c.bf16 %v739, %v736
        %v830 = vpack.c.bf16 %v747, %v744
        %v831 = vpack.c.bf16 %v755, %v752
        %v832 = vpack.c.bf16 %v763, %v760
        %v833 = vpack.c.bf16 %v771, %v768
        %v834 = vpack.c.bf16 %v779, %v776
        %v835 = vpack.c.bf16 %v787, %v784
        %v836 = vpack.c.bf16 %v795, %v792
        %v837 = vpack.c.bf16 %v803, %v800
        %v870 = vunpack.c.l.b16 %v806
        %v871 = vunpack.c.h.b16 %v806
        %v872 = vunpack.c.l.b16 %v807
        %v873 = vunpack.c.h.b16 %v807
        %v874 = vunpack.c.l.b16 %v808
        %v875 = vunpack.c.h.b16 %v808
        %v876 = vunpack.c.l.b16 %v809
        %v877 = vunpack.c.h.b16 %v809
        %v878 = vunpack.c.l.b16 %v810
        %v879 = vunpack.c.h.b16 %v810
        %v880 = vunpack.c.l.b16 %v811
        %v881 = vunpack.c.h.b16 %v811
        %v882 = vunpack.c.l.b16 %v812
        %v883 = vunpack.c.h.b16 %v812
        %v884 = vunpack.c.l.b16 %v813
        %v885 = vunpack.c.h.b16 %v813
        %v886 = vunpack.c.l.b16 %v814
        %v887 = vunpack.c.h.b16 %v814
        %v888 = vunpack.c.l.b16 %v815
        %v889 = vunpack.c.h.b16 %v815
        %v890 = vunpack.c.l.b16 %v816
        %v891 = vunpack.c.h.b16 %v816
        %v892 = vunpack.c.l.b16 %v817
        %v893 = vunpack.c.h.b16 %v817
        %v894 = vunpack.c.l.b16 %v818
        %v895 = vunpack.c.h.b16 %v818
        %v896 = vunpack.c.l.b16 %v819
        %v897 = vunpack.c.h.b16 %v819
        %v898 = vunpack.c.l.b16 %v820
        %v899 = vunpack.c.h.b16 %v820
        %v900 = vunpack.c.l.b16 %v821
        %v901 = vunpack.c.h.b16 %v821
        %v902 = vunpack.c.l.b16 %v822
        %v903 = vunpack.c.h.b16 %v822
        %v904 = vunpack.c.l.b16 %v823
        %v905 = vunpack.c.h.b16 %v823
        %v906 = vunpack.c.l.b16 %v824
        %v907 = vunpack.c.h.b16 %v824
        %v908 = vunpack.c.l.b16 %v825
        %v909 = vunpack.c.h.b16 %v825
        %v910 = vunpack.c.l.b16 %v826
        %v911 = vunpack.c.h.b16 %v826
        %v912 = vunpack.c.l.b16 %v827
        %v913 = vunpack.c.h.b16 %v827
        %v914 = vunpack.c.l.b16 %v828
        %v915 = vunpack.c.h.b16 %v828
        %v916 = vunpack.c.l.b16 %v829
        %v917 = vunpack.c.h.b16 %v829
        %v918 = vunpack.c.l.b16 %v830
        %v919 = vunpack.c.h.b16 %v830
        %v920 = vunpack.c.l.b16 %v831
        %v921 = vunpack.c.h.b16 %v831
        %v922 = vunpack.c.l.b16 %v832
        %v923 = vunpack.c.h.b16 %v832
        %v924 = vunpack.c.l.b16 %v833
        %v925 = vunpack.c.h.b16 %v833
        %v926 = vunpack.c.l.b16 %v834
        %v927 = vunpack.c.h.b16 %v834
        %v928 = vunpack.c.l.b16 %v835
        %v929 = vunpack.c.h.b16 %v835
        %v930 = vunpack.c.l.b16 %v836
        %v931 = vunpack.c.h.b16 %v836
        %v932 = vunpack.c.l.b16 %v837
        %v933 = vunpack.c.h.b16 %v837
        %v934 = vpack.c.b16 %v870, %v870
        %v935 = vpack.c.b16 %v871, %v871
        %v936 = vpack.c.b16 %v872, %v872
        %v937 = vpack.c.b16 %v873, %v873
        %v938 = vpack.c.b16 %v874, %v874
        %v939 = vpack.c.b16 %v875, %v875
        %v940 = vpack.c.b16 %v876, %v876
        %v941 = vpack.c.b16 %v877, %v877
        %v942 = vpack.c.b16 %v878, %v878
        %v943 = vpack.c.b16 %v879, %v879
        %v944 = vpack.c.b16 %v880, %v880
        %v945 = vpack.c.b16 %v881, %v881
        %v946 = vpack.c.b16 %v882, %v882
        %v947 = vpack.c.b16 %v883, %v883
        %v948 = vpack.c.b16 %v884, %v884
        %v949 = vpack.c.b16 %v885, %v885
        %v950 = vpack.c.b16 %v886, %v886
        %v951 = vpack.c.b16 %v887, %v887
        %v952 = vpack.c.b16 %v888, %v888
        %v953 = vpack.c.b16 %v889, %v889
        %v954 = vpack.c.b16 %v890, %v890
        %v955 = vpack.c.b16 %v891, %v891
        %v956 = vpack.c.b16 %v892, %v892
        %v957 = vpack.c.b16 %v893, %v893
        %v958 = vpack.c.b16 %v894, %v894
        %v959 = vpack.c.b16 %v895, %v895
        %v960 = vpack.c.b16 %v896, %v896
        %v961 = vpack.c.b16 %v897, %v897
        %v962 = vpack.c.b16 %v898, %v898
        %v963 = vpack.c.b16 %v899, %v899
        %v964 = vpack.c.b16 %v900, %v900
        %v965 = vpack.c.b16 %v901, %v901
        %v966 = vpack.c.b16 %v902, %v902
        %v967 = vpack.c.b16 %v903, %v903
        %v968 = vpack.c.b16 %v904, %v904
        %v969 = vpack.c.b16 %v905, %v905
        %v970 = vpack.c.b16 %v906, %v906
        %v971 = vpack.c.b16 %v907, %v907
        %v972 = vpack.c.b16 %v908, %v908
        %v973 = vpack.c.b16 %v909, %v909
        %v974 = vpack.c.b16 %v910, %v910
        %v975 = vpack.c.b16 %v911, %v911
        %v976 = vpack.c.b16 %v912, %v912
        %v977 = vpack.c.b16 %v913, %v913
        %v978 = vpack.c.b16 %v914, %v914
        %v979 = vpack.c.b16 %v915, %v915
        %v980 = vpack.c.b16 %v916, %v916
        %v981 = vpack.c.b16 %v917, %v917
        %v982 = vpack.c.b16 %v918, %v918
        %v983 = vpack.c.b16 %v919, %v919
        %v984 = vpack.c.b16 %v920, %v920
        %v985 = vpack.c.b16 %v921, %v921
        %v986 = vpack.c.b16 %v922, %v922
        %v987 = vpack.c.b16 %v923, %v923
        %v988 = vpack.c.b16 %v924, %v924
        %v989 = vpack.c.b16 %v925, %v925
        %v990 = vpack.c.b16 %v926, %v926
        %v991 = vpack.c.b16 %v927, %v927
        %v992 = vpack.c.b16 %v928, %v928
        %v993 = vpack.c.b16 %v929, %v929
        %v994 = vpack.c.b16 %v930, %v930
        %v995 = vpack.c.b16 %v931, %v931
        %v996 = vpack.c.b16 %v932, %v932
        %v997 = vpack.c.b16 %v933, %v933
        %vm1062 = vcmask 257024
        %1063 = vst.msk [vmem:[%s164] sm:$0xf] %vm1062, %v934
        %1064 = vst.msk [vmem:[%s164 + $0x4] sm:$0xf] %vm1062, %v935
        %1065 = vst.msk [vmem:[%s164 + $0x8] sm:$0xf] %vm1062, %v936
        %1066 = vst.msk [vmem:[%s164 + $0xc] sm:$0xf] %vm1062, %v937
        %1067 = vst.msk [vmem:[%s164 + $0x10] sm:$0xf] %vm1062, %v938
        %1068 = vst.msk [vmem:[%s164 + $0x14] sm:$0xf] %vm1062, %v939
        %1069 = vst.msk [vmem:[%s164 + $0x18] sm:$0xf] %vm1062, %v940
        %1070 = vst.msk [vmem:[%s164 + $0x1c] sm:$0xf] %vm1062, %v941
        %1071 = vst.msk [vmem:[%s164 + $0x20] sm:$0xf] %vm1062, %v942
        %1072 = vst.msk [vmem:[%s164 + $0x24] sm:$0xf] %vm1062, %v943
        %1073 = vst.msk [vmem:[%s164 + $0x28] sm:$0xf] %vm1062, %v944
        %1074 = vst.msk [vmem:[%s164 + $0x2c] sm:$0xf] %vm1062, %v945
        %1075 = vst.msk [vmem:[%s164 + $0x30] sm:$0xf] %vm1062, %v946
        %1076 = vst.msk [vmem:[%s164 + $0x34] sm:$0xf] %vm1062, %v947
        %1077 = vst.msk [vmem:[%s164 + $0x38] sm:$0xf] %vm1062, %v948
        %1078 = vst.msk [vmem:[%s164 + $0x3c] sm:$0xf] %vm1062, %v949
        %1079 = vst.msk [vmem:[%s164 + $0x40] sm:$0xf] %vm1062, %v950
        %1080 = vst.msk [vmem:[%s164 + $0x44] sm:$0xf] %vm1062, %v951
        %1081 = vst.msk [vmem:[%s164 + $0x48] sm:$0xf] %vm1062, %v952
        %1082 = vst.msk [vmem:[%s164 + $0x4c] sm:$0xf] %vm1062, %v953
        %1083 = vst.msk [vmem:[%s164 + $0x50] sm:$0xf] %vm1062, %v954
        %1084 = vst.msk [vmem:[%s164 + $0x54] sm:$0xf] %vm1062, %v955
        %1085 = vst.msk [vmem:[%s164 + $0x58] sm:$0xf] %vm1062, %v956
        %1086 = vst.msk [vmem:[%s164 + $0x5c] sm:$0xf] %vm1062, %v957
        %1087 = vst.msk [vmem:[%s164 + $0x60] sm:$0xf] %vm1062, %v958
        %1088 = vst.msk [vmem:[%s164 + $0x64] sm:$0xf] %vm1062, %v959
        %1089 = vst.msk [vmem:[%s164 + $0x68] sm:$0xf] %vm1062, %v960
        %1090 = vst.msk [vmem:[%s164 + $0x6c] sm:$0xf] %vm1062, %v961
        %1091 = vst.msk [vmem:[%s164 + $0x70] sm:$0xf] %vm1062, %v962
        %1092 = vst.msk [vmem:[%s164 + $0x74] sm:$0xf] %vm1062, %v963
        %1093 = vst.msk [vmem:[%s164 + $0x78] sm:$0xf] %vm1062, %v964
        %1094 = vst.msk [vmem:[%s164 + $0x7c] sm:$0xf] %vm1062, %v965
        %1095 = vst.msk [vmem:[%s164 + $0x80] sm:$0xf] %vm1062, %v966
        %1096 = vst.msk [vmem:[%s164 + $0x84] sm:$0xf] %vm1062, %v967
        %1097 = vst.msk [vmem:[%s164 + $0x88] sm:$0xf] %vm1062, %v968
        %1098 = vst.msk [vmem:[%s164 + $0x8c] sm:$0xf] %vm1062, %v969
        %1099 = vst.msk [vmem:[%s164 + $0x90] sm:$0xf] %vm1062, %v970
        %1100 = vst.msk [vmem:[%s164 + $0x94] sm:$0xf] %vm1062, %v971
        %1101 = vst.msk [vmem:[%s164 + $0x98] sm:$0xf] %vm1062, %v972
        %1102 = vst.msk [vmem:[%s164 + $0x9c] sm:$0xf] %vm1062, %v973
        %1103 = vst.msk [vmem:[%s164 + $0xa0] sm:$0xf] %vm1062, %v974
        %1104 = vst.msk [vmem:[%s164 + $0xa4] sm:$0xf] %vm1062, %v975
        %1105 = vst.msk [vmem:[%s164 + $0xa8] sm:$0xf] %vm1062, %v976
        %1106 = vst.msk [vmem:[%s164 + $0xac] sm:$0xf] %vm1062, %v977
        %1107 = vst.msk [vmem:[%s164 + $0xb0] sm:$0xf] %vm1062, %v978
        %1108 = vst.msk [vmem:[%s164 + $0xb4] sm:$0xf] %vm1062, %v979
        %1109 = vst.msk [vmem:[%s164 + $0xb8] sm:$0xf] %vm1062, %v980
        %1110 = vst.msk [vmem:[%s164 + $0xbc] sm:$0xf] %vm1062, %v981
        %1111 = vst.msk [vmem:[%s164 + $0xc0] sm:$0xf] %vm1062, %v982
        %1112 = vst.msk [vmem:[%s164 + $0xc4] sm:$0xf] %vm1062, %v983
        %1113 = vst.msk [vmem:[%s164 + $0xc8] sm:$0xf] %vm1062, %v984
        %1114 = vst.msk [vmem:[%s164 + $0xcc] sm:$0xf] %vm1062, %v985
        %1115 = vst.msk [vmem:[%s164 + $0xd0] sm:$0xf] %vm1062, %v986
        %1116 = vst.msk [vmem:[%s164 + $0xd4] sm:$0xf] %vm1062, %v987
        %1117 = vst.msk [vmem:[%s164 + $0xd8] sm:$0xf] %vm1062, %v988
        %1118 = vst.msk [vmem:[%s164 + $0xdc] sm:$0xf] %vm1062, %v989
        %1119 = vst.msk [vmem:[%s164 + $0xe0] sm:$0xf] %vm1062, %v990
        %1120 = vst.msk [vmem:[%s164 + $0xe4] sm:$0xf] %vm1062, %v991
        %1121 = vst.msk [vmem:[%s164 + $0xe8] sm:$0xf] %vm1062, %v992
        %1122 = vst.msk [vmem:[%s164 + $0xec] sm:$0xf] %vm1062, %v993
        %1123 = vst.msk [vmem:[%s164 + $0xf0] sm:$0xf] %vm1062, %v994
        %1124 = vst.msk [vmem:[%s164 + $0xf4] sm:$0xf] %vm1062, %v995
        %1125 = vst.msk [vmem:[%s164 + $0xf8] sm:$0xf] %vm1062, %v996
        %1126 = vst.msk [vmem:[%s164 + $0xfc] sm:$0xf] %vm1062, %v997
        %s1127 = sand.u32 %s93, 1
        %s1128 = scalar_lea.sflag [#allocation3], %s1127
        %s1129 = sand.u32 %s93, 1
        %s1130 = smul.addr %s1129, 256
        %s1131 = scalar_lea.vmem [#allocation2], %s1130
        // Predicated region
        $region33: #{conv2d.1} parent=31 // pred_check
          %p1132 = pneg %p103
        $region34: #{conv2d.1} parent=31 // pred_check_branch
          %1134 = sbr.rel (%p1132) target = $region36
        $region35: #{conv2d.1} parent=31 // pred_region
          %s1135 = smul.u32 64, %s17
          %s1137 = ssub.s32 4096, 4096
          %1138 = vsyncadd %s1128, %s1137
          %s1139 = smul.addr %s1135, 64
          %s1140 = scalar_lea.hbm %s3, %s1139
          %s1141 = sshll.u32 %s1131, 4
          %s1142 = int_to_ptr.vmem [resolvable:$true] %s1141
          %1147 = dma.vmem_to_hbm [thread:$0]  %s1142, 4096, %s1140, %s1128, 64, 64, 4
        $region36: #{conv2d.1} parent=31 // pred_fallthru
          _
      $region32: #{conv2d.1} parent=5 // pred_fallthru
        _
      %p1148 = scmp.le.s32.totalorder 2, %s12
      // Predicated region
      $region37: #{conv2d.1} parent=5 // pred_check
        %p1149 = pneg %p1148
      $region38: #{conv2d.1} parent=5 // pred_check_branch
        %1151 = sbr.rel (%p1149) target = $region40
      $region39: #{conv2d.1} parent=5 // pred_region
        %s1152 = ssub.s32 %s12, 2
        // Predicated region
        $region41: #{conv2d.1} parent=39 // pred_check
          %p1153 = pneg %p109
        $region42: #{conv2d.1} parent=39 // pred_check_branch
          %1155 = sbr.rel (%p1153) target = $region44
        $region43: #{conv2d.1} parent=39 // pred_region
          %s1156 = sand.u32 %s94, 1
          %s1157 = scalar_lea.sflag [#allocation3], %s1156
          %s1158 = sand.u32 %s94, 1
          %s1159 = smul.addr %s1158, 256
          %s1160 = scalar_lea.vmem [#allocation2], %s1159
          %1161 = dma.done %s1157, 4096
        $region44: #{conv2d.1} parent=39 // pred_fallthru
          _
      $region40: #{conv2d.1} parent=5 // pred_fallthru
        _
    $region6: #{conv2d.1} parent=1 // loop_footer
      %s16 = sadd.s32 1, %s12
    $region7: #{conv2d.1} parent=1 // loop_footer_branch
      %11 = sbr.rel target = $region3
    $region8: #{conv2d.1} parent=1 // loop_exit
      _
    %1162 = vsyncpa [#allocation3], 1
    %s1163 = scalar_lea.sflag [#allocation3], 1
    %1164 = vsyncpa %s1163, 1

</llo_original>
